<compile_context>
chip_gen: v5e
topology: v5e:2x2
jax: 0.10.0
libtpu: 0.0.40
codegen_flags: <defaults>
</compile_context>

<pallas_src>
import functools
import math

import jax
import jax.numpy as jnp
from jax.experimental import pallas as pl
from jax.experimental.pallas import tpu as pltpu

LEAKY_SLOPE = 0.01   # F.leaky_relu default negative_slope
LN_EPS = 1e-5        # nn.LayerNorm default eps
LANE = 128
SUBLANE_PACK = 16    # bf16 sublane packing; batch tiles are multiples of this


def _round_up(n, m):
    return (n + m - 1) // m * m


def _pad2(a, rows, cols):
    r, c = a.shape
    if r == rows and c == cols:
        return a
    return jnp.pad(a, ((0, rows - r), (0, cols - c)))


# ---------------------------------------------------------------------------
# one-time, module-level capability / hardware queries
# ---------------------------------------------------------------------------
_WEIGHT_SINGLE_BUFFER = [hasattr(pl, "Buffered")]   # flips to False once if Buffered(1) is rejected
_VMEM_CAPACITY = []                                  # cached physical per-core VMEM bytes


def _vmem_capacity_bytes():
    if not _VMEM_CAPACITY:
        cap = 64 << 20   # conservative default (valid on every generation incl. v7x)
        if hasattr(pltpu, "get_tpu_info"):
            try:
                cap = int(pltpu.get_tpu_info().vmem_capacity_bytes)
            except (AttributeError, RuntimeError, ValueError, TypeError):
                pass   # read-only query with a safe default; never masks kernel errors
        _VMEM_CAPACITY.append(cap)
    return _VMEM_CAPACITY[0]


def _vmem_budget_cap():
    # Leave ~1/8 headroom for compiler scratch / internal buffers:
    # v7x (64 MiB/TC) -> ~56 MiB, v5e/v6e (128 MiB) -> ~112 MiB.
    return (_vmem_capacity_bytes() // 8) * 7


# ---------------------------------------------------------------------------
# kernel
# ---------------------------------------------------------------------------
def _leaky_relu(h):
    return jnp.where(h > 0, h, LEAKY_SLOPE * h)


def _layer_norm(h, gamma, beta, inv_n):
    """LayerNorm over the last axis.

    Padded lanes of h are exactly 0 (zero-padded weight columns / bias), so they contribute
    nothing to sum(h) or sum(h*h); zero-padded gamma/beta re-zero them on the way out.
    No mask / iota needed (saves two full-width VPU passes per call).
    """
    mean = jnp.sum(h, axis=-1, keepdims=True) * inv_n
    ex2 = jnp.sum(h * h, axis=-1, keepdims=True) * inv_n
    var = jnp.maximum(ex2 - mean * mean, 0.0)   # guard tiny cancellation
    return (h - mean) * jax.lax.rsqrt(var + LN_EPS) * gamma + beta


def nn_pg_kernel(x_ref, w1_ref, v1_ref, w2_ref, v2_ref, w3_ref, b3_ref, o_ref,
                 *, hid_dim, tanh_out):
    f32 = jnp.float32
    bf16 = jnp.bfloat16
    inv_n = 1.0 / float(hid_dim)

    x = x_ref[...]          # (block_b, obs_p) bf16 -- already MXU dtype, no in-kernel cast
    v1 = v1_ref[...]        # (3, hid_p) f32; rows = bias, gamma, beta
    v2 = v2_ref[...]

    # fc1 -> LayerNorm -> leaky_relu (bf16 MXU matmul, f32 accumulation & elementwise math)
    h = jnp.dot(x, w1_ref[...], preferred_element_type=f32) + v1[0:1]
    h = _leaky_relu(_layer_norm(h, v1[1:2], v1[2:3], inv_n))

    # fc2 -> LayerNorm -> leaky_relu
    h = jnp.dot(h.astype(bf16), w2_ref[...], preferred_element_type=f32) + v2[0:1]
    h = _leaky_relu(_layer_norm(h, v2[1:2], v2[2:3], inv_n))

    # fc3 (optional tanh head)
    h = jnp.dot(h.astype(bf16), w3_ref[...], preferred_element_type=f32) + b3_ref[...]
    if tanh_out:
        h = jnp.tanh(h)

    o_ref[...] = h.astype(o_ref.dtype)


# ---------------------------------------------------------------------------
# host-side wrapper
# ---------------------------------------------------------------------------
def prepare_params(params):
    """One-time padding / bf16 packing of NN_PG parameters for the kernel.

    Call once per parameter set (e.g. per optimizer step), NOT per forward call:
    this keeps the per-call XLA pad/cast/concat ops out of the hot path.
    """
    obs_dim, hid_dim = params["w1"].shape
    act_dim = params["w3"].shape[1]
    obs_p = _round_up(obs_dim, 8)        # sublane granularity only -- NOT padded to 128
    hid_p = _round_up(hid_dim, LANE)
    act_p = _round_up(act_dim, LANE)
    f32, bf16 = jnp.float32, jnp.bfloat16

    def stack_vec(b, g, be):
        return jnp.concatenate([_pad2(b, 1, hid_p), _pad2(g, 1, hid_p),
                                _pad2(be, 1, hid_p)], axis=0).astype(f32)

    # NOTE: for large models, hid_dim multiples of 256 best fill the v6e/v7x MXU passes.
    return {
        "__prepared__": True,
        "dims": (obs_dim, hid_dim, act_dim, obs_p, hid_p, act_p),
        "w1": _pad2(params["w1"], obs_p, hid_p).astype(bf16),
        "w2": _pad2(params["w2"], hid_p, hid_p).astype(bf16),
        "w3": _pad2(params["w3"], hid_p, act_p).astype(bf16),
        "v1": stack_vec(params["b1"], params["g1"], params["be1"]),
        "v2": stack_vec(params["b2"], params["g2"], params["be2"]),
        "b3": _pad2(params["b3"], 1, act_p).astype(f32),
    }


def _pick_block_b(B, requested):
    if requested is not None:
        return max(SUBLANE_PACK, _round_up(requested, SUBLANE_PACK))
    # Target ~8 grid steps so the x/o pipeline double-buffers even after the batch axis is
    # sharded across TensorCores; cap tiles at 256 rows on 64 MiB-VMEM chips (v7x), 512 otherwise.
    cap = 256 if _vmem_capacity_bytes() <= (96 << 20) else 512
    return max(SUBLANE_PACK, min(cap, _round_up(pl.cdiv(B, 8), SUBLANE_PACK)))


def _weight_spec(shape, single_buffer):
    if single_buffer:
        # Grid-invariant weights: one VMEM buffer is enough (halves resident weight VMEM).
        return pl.BlockSpec(shape, lambda i: (0, 0), pipeline_mode=pl.Buffered(1))
    return pl.BlockSpec(shape, lambda i: (0, 0))


def nn_pg_forward_prepared(x, prep, *, tanh_out=False, block_b=None):
    obs_dim, hid_dim, act_dim, obs_p, hid_p, act_p = prep["dims"]
    B = x.shape[0]
    assert x.shape[1] == obs_dim

    block_b = _pick_block_b(B, block_b)
    b_pad = _round_up(B, block_b)
    grid = (b_pad // block_b,)

    f32, bf16 = jnp.float32, jnp.bfloat16
    # x is streamed every grid step: cast to bf16 host-side and keep it feature-unpadded
    # (obs_p is only rounded to a sublane multiple; the lane dim equals the full array dim).
    xb = x.astype(bf16)
    if xb.shape != (b_pad, obs_p):
        xb = jnp.pad(xb, ((0, b_pad - B), (0, obs_p - obs_dim)))

    # VMEM budget (worst case: weights double-buffered if Buffered(1) is unavailable),
    # clamped to a generation-aware cap (v7x ~56 MiB, v5e/v6e ~112 MiB).
    bytes_w = 2 * (obs_p * hid_p + hid_p * hid_p + hid_p * act_p)           # bf16 weights
    bytes_vec = 4 * (6 * hid_p + act_p)                                      # f32 vectors
    bytes_io = 2 * 2 * block_b * obs_p + 4 * 2 * block_b * act_p             # x (bf16) + o (f32), 2x buffered
    bytes_act = 4 * 8 * block_b * hid_p                                      # live f32 intermediates
    need = 2 * bytes_w + 2 * bytes_vec + bytes_io + bytes_act + (8 << 20)
    vmem_limit = int(max(32 << 20, min(need, _vmem_budget_cap())))
    # TODO(synk): for hid_dim >~ 2K, stream fc2 over a trailing "arbitrary" K grid axis
    # (f32 VMEM accumulator + pl.when init/finalize) instead of holding (hid,hid) resident;
    # on v7x an fp8 weight path would additionally halve the resident footprint.

    kernel = functools.partial(nn_pg_kernel, hid_dim=hid_dim, tanh_out=tanh_out)
    x_spec = pl.BlockSpec((block_b, obs_p), lambda i: (i, 0))
    o_spec = pl.BlockSpec((block_b, act_p), lambda i: (i, 0))

    def build(single_buffer):
        return pl.pallas_call(
            kernel,
            out_shape=jax.ShapeDtypeStruct((b_pad, act_p), f32),
            grid_spec=pltpu.PrefetchScalarGridSpec(
                num_scalar_prefetch=0,
                grid=grid,
                in_specs=[x_spec,
                          _weight_spec((obs_p, hid_p), single_buffer),
                          _weight_spec((3, hid_p), single_buffer),
                          _weight_spec((hid_p, hid_p), single_buffer),
                          _weight_spec((3, hid_p), single_buffer),
                          _weight_spec((hid_p, act_p), single_buffer),
                          _weight_spec((1, act_p), single_buffer)],
                out_specs=o_spec),
            compiler_params=pltpu.CompilerParams(
                dimension_semantics=("parallel",),
                vmem_limit_bytes=vmem_limit))

    operands = (xb, prep["w1"], prep["v1"], prep["w2"], prep["v2"], prep["w3"], prep["b3"])
    if _WEIGHT_SINGLE_BUFFER[0]:
        try:
            out = build(True)(*operands)
        except (TypeError, ValueError, NotImplementedError, pltpu.LoweringException):
            # One-time downgrade: this jax build rejects Buffered(1) weight specs.
            _WEIGHT_SINGLE_BUFFER[0] = False
            out = build(False)(*operands)
    else:
        out = build(False)(*operands)

    return out[:B, :act_dim]


def nn_pg_forward(x, params, *, tanh_out=False, block_b=None):
    """Forward pass of NN_PG. `params` may be raw (init_params) or pre-prepared (prepare_params)."""
    prep = params if params.get("__prepared__") else prepare_params(params)
    return nn_pg_forward_prepared(x, prep, tanh_out=tanh_out, block_b=block_b)


# ---------------------------------------------------------------------------
# init + pure-JAX reference (mirrors the PyTorch module)
# ---------------------------------------------------------------------------
def init_params(key, obs_dim, hid_dim, act_dim):
    """Deterministic init mirroring the PyTorch module; weights stored (in,out) so h = x @ W + b."""
    ks = jax.random.split(key, 6)

    def kaiming_w(k, fan_in, fan_out, gain):
        std = gain / math.sqrt(fan_in)
        # sample in PyTorch layout (out,in) then transpose to (in,out)
        return (std * jax.random.normal(k, (fan_out, fan_in), jnp.float32)).T

    def uniform_b(k, fan_in, fan_out):
        bound = 1.0 / math.sqrt(fan_in)
        return jax.random.uniform(k, (1, fan_out), jnp.float32, -bound, bound)

    gain_lrelu = math.sqrt(2.0)   # kaiming_normal_(nonlinearity='leaky_relu') with default a=0
    gain_linear = 1.0
    return {
        "w1": kaiming_w(ks[0], obs_dim, hid_dim, gain_lrelu),
        "b1": uniform_b(ks[1], obs_dim, hid_dim),
        "g1": jnp.ones((1, hid_dim), jnp.float32),
        "be1": jnp.zeros((1, hid_dim), jnp.float32),
        "w2": kaiming_w(ks[2], hid_dim, hid_dim, gain_lrelu),
        "b2": uniform_b(ks[3], hid_dim, hid_dim),
        "g2": jnp.ones((1, hid_dim), jnp.float32),
        "be2": jnp.zeros((1, hid_dim), jnp.float32),
        "w3": kaiming_w(ks[4], hid_dim, act_dim, gain_linear),
        "b3": uniform_b(ks[5], hid_dim, act_dim),
        "log_std": jnp.zeros((1, act_dim), jnp.float32),   # unused in forward()
    }


def nn_pg_reference(x, p, tanh_out=False, bf16_matmuls=True):
    """Pure-JAX reference.  bf16_matmuls=True mirrors the kernel's MXU precision exactly."""
    cast = (lambda a: a.astype(jnp.bfloat16)) if bf16_matmuls else (lambda a: a)

    def ln(h, g, b):
        m = h.mean(-1, keepdims=True)
        v = ((h - m) ** 2).mean(-1, keepdims=True)
        return (h - m) * jax.lax.rsqrt(v + LN_EPS) * g + b

    lrelu = lambda h: jnp.where(h > 0, h, LEAKY_SLOPE * h)
    dot = lambda a, w: jnp.dot(cast(a), cast(w), preferred_element_type=jnp.float32)
    h = lrelu(ln(dot(x, p["w1"]) + p["b1"], p["g1"], p["be1"]))
    h = lrelu(ln(dot(h, p["w2"]) + p["b2"], p["g2"], p["be2"]))
    h = dot(h, p["w3"]) + p["b3"]
    return jnp.tanh(h) if tanh_out else h


if __name__ == "__main__":
    obs_dim, hid_dim, act_dim, batch = 16, 64, 8, 32
    key = jax.random.PRNGKey(0)
    k_x, k_p = jax.random.split(key)

    x = jax.random.normal(k_x, (batch, obs_dim), jnp.float32)
    params = init_params(k_p, obs_dim, hid_dim, act_dim)
    prep = prepare_params(params)   # one-time parameter prep, hoisted out of the hot path

    out = jax.block_until_ready(nn_pg_forward(x, prep, tanh_out=False))
    assert out.shape == (batch, act_dim)

    # Exact-precision mirror of the kernel (bf16 matmul operands, f32 everything else).
    ref = nn_pg_reference(x, params, tanh_out=False, bf16_matmuls=True)
    assert jnp.allclose(out, ref, atol=5e-3, rtol=5e-3)

    # Loose sanity check against the full-f32 forward (difference is bf16 rounding only).
    ref32 = nn_pg_reference(x, params, tanh_out=False, bf16_matmuls=False)
    assert jnp.allclose(out, ref32, atol=1e-1, rtol=1e-1)

    # Exercise the tanh head as well (reuses the prepared params).
    out_t = jax.block_until_ready(nn_pg_forward(x, prep, tanh_out=True))
    ref_t = nn_pg_reference(x, params, tanh_out=True, bf16_matmuls=True)
    assert jnp.allclose(out_t, ref_t, atol=5e-3, rtol=5e-3)

    # Raw (unprepared) params path still works.
    out_raw = jax.block_until_ready(nn_pg_forward(x, params, tanh_out=False))
    assert jnp.allclose(out_raw, ref, atol=5e-3, rtol=5e-3)

    print("KERNEL_OK")
</pallas_src>

<mosaic_0001>
module attributes {stable_mosaic.version = 11 : i64} {
  func.func @nn_pg_kernel(%arg0: i32, %arg1: memref<16x16xbf16, #tpu.memory_space<vmem>>, %arg2: memref<16x128xbf16, #tpu.memory_space<vmem>>, %arg3: memref<3x128xf32, #tpu.memory_space<vmem>>, %arg4: memref<128x128xbf16, #tpu.memory_space<vmem>>, %arg5: memref<3x128xf32, #tpu.memory_space<vmem>>, %arg6: memref<128x128xbf16, #tpu.memory_space<vmem>>, %arg7: memref<1x128xf32, #tpu.memory_space<vmem>>, %arg8: memref<16x128xf32, #tpu.memory_space<vmem>>) attributes {dimension_semantics = [#tpu.dimension_semantics<parallel>], iteration_bounds = array<i64: 2>, scalar_prefetch = 0 : i64, scratch_operands = 0 : i64, tpu.core_type = #tpu.core_type<tc>, window_params = [{transform_indices = @transform_0, window_bounds = array<i64: 16, 16>}, {pipeline_mode = #tpu.pipeline_mode<synchronous>, transform_indices = @transform_1, window_bounds = array<i64: 16, 128>}, {pipeline_mode = #tpu.pipeline_mode<synchronous>, transform_indices = @transform_2, window_bounds = array<i64: 3, 128>}, {pipeline_mode = #tpu.pipeline_mode<synchronous>, transform_indices = @transform_3, window_bounds = array<i64: 128, 128>}, {pipeline_mode = #tpu.pipeline_mode<synchronous>, transform_indices = @transform_4, window_bounds = array<i64: 3, 128>}, {pipeline_mode = #tpu.pipeline_mode<synchronous>, transform_indices = @transform_5, window_bounds = array<i64: 128, 128>}, {pipeline_mode = #tpu.pipeline_mode<synchronous>, transform_indices = @transform_6, window_bounds = array<i64: 1, 128>}, {transform_indices = @transform_7, window_bounds = array<i64: 16, 128>}]} {
    %c0 = arith.constant 0 : index
    %c0_0 = arith.constant 0 : index
    %0 = vector.load %arg1[%c0, %c0_0] : memref<16x16xbf16, #tpu.memory_space<vmem>>, vector<16x16xbf16>
    %c0_1 = arith.constant 0 : index
    %c0_2 = arith.constant 0 : index
    %1 = vector.load %arg3[%c0_1, %c0_2] : memref<3x128xf32, #tpu.memory_space<vmem>>, vector<3x128xf32>
    %c0_3 = arith.constant 0 : index
    %c0_4 = arith.constant 0 : index
    %2 = vector.load %arg5[%c0_3, %c0_4] : memref<3x128xf32, #tpu.memory_space<vmem>>, vector<3x128xf32>
    %c0_5 = arith.constant 0 : index
    %c0_6 = arith.constant 0 : index
    %3 = vector.load %arg2[%c0_5, %c0_6] : memref<16x128xbf16, #tpu.memory_space<vmem>>, vector<16x128xbf16>
    %cst = arith.constant dense<0.000000e+00> : vector<16x128xf32>
    %4 = tpu.matmul %0, %3, %cst {dimension_numbers = #tpu.dot_dimension_numbers<[1], [0], [0], [1], [0, 0, 1, 1], [], []>} : vector<16x16xbf16>, vector<16x128xbf16>, vector<16x128xf32> -> vector<16x128xf32>
    %5 = vector.extract_strided_slice %1 {offsets = [0, 0], sizes = [1, 128], strides = [1, 1]} : vector<3x128xf32> to vector<1x128xf32>
    %6 = vector.broadcast %5 : vector<1x128xf32> to vector<16x128xf32>
    %7 = arith.addf %4, %6 : vector<16x128xf32>
    %8 = vector.extract_strided_slice %1 {offsets = [1, 0], sizes = [1, 128], strides = [1, 1]} : vector<3x128xf32> to vector<1x128xf32>
    %9 = vector.extract_strided_slice %1 {offsets = [2, 0], sizes = [1, 128], strides = [1, 1]} : vector<3x128xf32> to vector<1x128xf32>
    %cst_7 = arith.constant dense<0.000000e+00> : vector<16xf32>
    %10 = vector.multi_reduction <add>, %7, %cst_7 [1] : vector<16x128xf32> to vector<16xf32>
    %11 = vector.shape_cast %10 : vector<16xf32> to vector<16x1xf32>
    %cst_8 = arith.constant 1.562500e-02 : f32
    %12 = vector.broadcast %cst_8 : f32 to vector<16x1xf32>
    %13 = arith.mulf %11, %12 : vector<16x1xf32>
    %14 = arith.mulf %7, %7 : vector<16x128xf32>
    %cst_9 = arith.constant dense<0.000000e+00> : vector<16xf32>
    %15 = vector.multi_reduction <add>, %14, %cst_9 [1] : vector<16x128xf32> to vector<16xf32>
    %16 = vector.shape_cast %15 : vector<16xf32> to vector<16x1xf32>
    %cst_10 = arith.constant 1.562500e-02 : f32
    %17 = vector.broadcast %cst_10 : f32 to vector<16x1xf32>
    %18 = arith.mulf %16, %17 : vector<16x1xf32>
    %19 = arith.mulf %13, %13 : vector<16x1xf32>
    %20 = arith.subf %18, %19 : vector<16x1xf32>
    %cst_11 = arith.constant 0.000000e+00 : f32
    %21 = vector.broadcast %cst_11 : f32 to vector<16x1xf32>
    %22 = arith.maximumf %20, %21 : vector<16x1xf32>
    %23 = vector.broadcast %13 : vector<16x1xf32> to vector<16x128xf32>
    %24 = arith.subf %7, %23 : vector<16x128xf32>
    %cst_12 = arith.constant 9.99999974E-6 : f32
    %25 = vector.broadcast %cst_12 : f32 to vector<16x1xf32>
    %26 = arith.addf %22, %25 : vector<16x1xf32>
    %27 = math.rsqrt %26 : vector<16x1xf32>
    %28 = vector.broadcast %27 : vector<16x1xf32> to vector<16x128xf32>
    %29 = arith.mulf %24, %28 : vector<16x128xf32>
    %30 = vector.broadcast %8 : vector<1x128xf32> to vector<16x128xf32>
    %31 = arith.mulf %29, %30 : vector<16x128xf32>
    %32 = vector.broadcast %9 : vector<1x128xf32> to vector<16x128xf32>
    %33 = arith.addf %31, %32 : vector<16x128xf32>
    %cst_13 = arith.constant 0.000000e+00 : f32
    %34 = vector.broadcast %cst_13 : f32 to vector<16x128xf32>
    %35 = arith.cmpf ogt, %33, %34 : vector<16x128xf32>
    %cst_14 = arith.constant 0.00999999977 : f32
    %36 = vector.broadcast %cst_14 : f32 to vector<16x128xf32>
    %37 = arith.mulf %36, %33 : vector<16x128xf32>
    %38 = arith.select %35, %33, %37 : vector<16x128xi1>, vector<16x128xf32>
    %39 = arith.truncf %38 : vector<16x128xf32> to vector<16x128xbf16>
    %c0_15 = arith.constant 0 : index
    %c0_16 = arith.constant 0 : index
    %40 = vector.load %arg4[%c0_15, %c0_16] : memref<128x128xbf16, #tpu.memory_space<vmem>>, vector<128x128xbf16>
    %cst_17 = arith.constant dense<0.000000e+00> : vector<16x128xf32>
    %41 = tpu.matmul %39, %40, %cst_17 {dimension_numbers = #tpu.dot_dimension_numbers<[1], [0], [0], [1], [0, 0, 1, 1], [], []>} : vector<16x128xbf16>, vector<128x128xbf16>, vector<16x128xf32> -> vector<16x128xf32>
    %42 = vector.extract_strided_slice %2 {offsets = [0, 0], sizes = [1, 128], strides = [1, 1]} : vector<3x128xf32> to vector<1x128xf32>
    %43 = vector.broadcast %42 : vector<1x128xf32> to vector<16x128xf32>
    %44 = arith.addf %41, %43 : vector<16x128xf32>
    %45 = vector.extract_strided_slice %2 {offsets = [1, 0], sizes = [1, 128], strides = [1, 1]} : vector<3x128xf32> to vector<1x128xf32>
    %46 = vector.extract_strided_slice %2 {offsets = [2, 0], sizes = [1, 128], strides = [1, 1]} : vector<3x128xf32> to vector<1x128xf32>
    %cst_18 = arith.constant dense<0.000000e+00> : vector<16xf32>
    %47 = vector.multi_reduction <add>, %44, %cst_18 [1] : vector<16x128xf32> to vector<16xf32>
    %48 = vector.shape_cast %47 : vector<16xf32> to vector<16x1xf32>
    %cst_19 = arith.constant 1.562500e-02 : f32
    %49 = vector.broadcast %cst_19 : f32 to vector<16x1xf32>
    %50 = arith.mulf %48, %49 : vector<16x1xf32>
    %51 = arith.mulf %44, %44 : vector<16x128xf32>
    %cst_20 = arith.constant dense<0.000000e+00> : vector<16xf32>
    %52 = vector.multi_reduction <add>, %51, %cst_20 [1] : vector<16x128xf32> to vector<16xf32>
    %53 = vector.shape_cast %52 : vector<16xf32> to vector<16x1xf32>
    %cst_21 = arith.constant 1.562500e-02 : f32
    %54 = vector.broadcast %cst_21 : f32 to vector<16x1xf32>
    %55 = arith.mulf %53, %54 : vector<16x1xf32>
    %56 = arith.mulf %50, %50 : vector<16x1xf32>
    %57 = arith.subf %55, %56 : vector<16x1xf32>
    %cst_22 = arith.constant 0.000000e+00 : f32
    %58 = vector.broadcast %cst_22 : f32 to vector<16x1xf32>
    %59 = arith.maximumf %57, %58 : vector<16x1xf32>
    %60 = vector.broadcast %50 : vector<16x1xf32> to vector<16x128xf32>
    %61 = arith.subf %44, %60 : vector<16x128xf32>
    %cst_23 = arith.constant 9.99999974E-6 : f32
    %62 = vector.broadcast %cst_23 : f32 to vector<16x1xf32>
    %63 = arith.addf %59, %62 : vector<16x1xf32>
    %64 = math.rsqrt %63 : vector<16x1xf32>
    %65 = vector.broadcast %64 : vector<16x1xf32> to vector<16x128xf32>
    %66 = arith.mulf %61, %65 : vector<16x128xf32>
    %67 = vector.broadcast %45 : vector<1x128xf32> to vector<16x128xf32>
    %68 = arith.mulf %66, %67 : vector<16x128xf32>
    %69 = vector.broadcast %46 : vector<1x128xf32> to vector<16x128xf32>
    %70 = arith.addf %68, %69 : vector<16x128xf32>
    %cst_24 = arith.constant 0.000000e+00 : f32
    %71 = vector.broadcast %cst_24 : f32 to vector<16x128xf32>
    %72 = arith.cmpf ogt, %70, %71 : vector<16x128xf32>
    %cst_25 = arith.constant 0.00999999977 : f32
    %73 = vector.broadcast %cst_25 : f32 to vector<16x128xf32>
    %74 = arith.mulf %73, %70 : vector<16x128xf32>
    %75 = arith.select %72, %70, %74 : vector<16x128xi1>, vector<16x128xf32>
    %76 = arith.truncf %75 : vector<16x128xf32> to vector<16x128xbf16>
    %c0_26 = arith.constant 0 : index
    %c0_27 = arith.constant 0 : index
    %77 = vector.load %arg6[%c0_26, %c0_27] : memref<128x128xbf16, #tpu.memory_space<vmem>>, vector<128x128xbf16>
    %cst_28 = arith.constant dense<0.000000e+00> : vector<16x128xf32>
    %78 = tpu.matmul %76, %77, %cst_28 {dimension_numbers = #tpu.dot_dimension_numbers<[1], [0], [0], [1], [0, 0, 1, 1], [], []>} : vector<16x128xbf16>, vector<128x128xbf16>, vector<16x128xf32> -> vector<16x128xf32>
    %c0_29 = arith.constant 0 : index
    %c0_30 = arith.constant 0 : index
    %79 = vector.load %arg7[%c0_29, %c0_30] : memref<1x128xf32, #tpu.memory_space<vmem>>, vector<1x128xf32>
    %80 = vector.broadcast %79 : vector<1x128xf32> to vector<16x128xf32>
    %81 = arith.addf %78, %80 : vector<16x128xf32>
    %c0_31 = arith.constant 0 : index
    %c0_32 = arith.constant 0 : index
    %82 = vector.load %arg8[%c0_31, %c0_32] : memref<16x128xf32, #tpu.memory_space<vmem>>, vector<16x128xf32>
    tpu.vector_store %arg8[%c0_31, %c0_32], %81 {strides = array<i32>} : memref<16x128xf32, #tpu.memory_space<vmem>>, vector<16x128xf32>,
    return
  }
  func.func @transform_0(%arg0: i32) -> (i32, i32) {
    %c0_i32 = arith.constant 0 : i32
    %c0_i32_0 = arith.constant 0 : i32
    return %arg0, %c0_i32 : i32, i32
  }
  func.func @transform_1(%arg0: i32) -> (i32, i32) {
    %c0_i32 = arith.constant 0 : i32
    %c0_i32_0 = arith.constant 0 : i32
    %c0_i32_1 = arith.constant 0 : i32
    return %c0_i32, %c0_i32_0 : i32, i32
  }
  func.func @transform_2(%arg0: i32) -> (i32, i32) {
    %c0_i32 = arith.constant 0 : i32
    %c0_i32_0 = arith.constant 0 : i32
    %c0_i32_1 = arith.constant 0 : i32
    return %c0_i32, %c0_i32_0 : i32, i32
  }
  func.func @transform_3(%arg0: i32) -> (i32, i32) {
    %c0_i32 = arith.constant 0 : i32
    %c0_i32_0 = arith.constant 0 : i32
    %c0_i32_1 = arith.constant 0 : i32
    return %c0_i32, %c0_i32_0 : i32, i32
  }
  func.func @transform_4(%arg0: i32) -> (i32, i32) {
    %c0_i32 = arith.constant 0 : i32
    %c0_i32_0 = arith.constant 0 : i32
    %c0_i32_1 = arith.constant 0 : i32
    return %c0_i32, %c0_i32_0 : i32, i32
  }
  func.func @transform_5(%arg0: i32) -> (i32, i32) {
    %c0_i32 = arith.constant 0 : i32
    %c0_i32_0 = arith.constant 0 : i32
    %c0_i32_1 = arith.constant 0 : i32
    return %c0_i32, %c0_i32_0 : i32, i32
  }
  func.func @transform_6(%arg0: i32) -> (i32, i32) {
    %c0_i32 = arith.constant 0 : i32
    %c0_i32_0 = arith.constant 0 : i32
    %c0_i32_1 = arith.constant 0 : i32
    return %c0_i32, %c0_i32_0 : i32, i32
  }
  func.func @transform_7(%arg0: i32) -> (i32, i32) {
    %c0_i32 = arith.constant 0 : i32
    %c0_i32_0 = arith.constant 0 : i32
    return %arg0, %c0_i32 : i32, i32
  }
}

</mosaic_0001>

<llo_original>
// kernel: tpu_custom_call.1
$region0: #{tpu_custom_call.1}
  #allocation0 [shape = 'u32[]', space=smem, size = 0x4, offset = 0x4, fixed_abs, tag = 'smem constant byte address 0x4 - core index']
  #allocation1 [shape = 'u32[72,128]{1,0:T(1,128)}', space=vmem, size = 0x9000, scoped, tag = 'internal scratch']
  %s0 = inlined_call_operand.vmem [shape: bf16[32,16], index: 0, kind: input, shape index: {}]
  %s1 = inlined_call_operand.vmem [shape: bf16[16,128], index: 1, kind: input, shape index: {}]
  %s2 = inlined_call_operand.vmem [shape: f32[3,128], index: 2, kind: input, shape index: {}]
  %s3 = inlined_call_operand.hbm [shape: bf16[128,128], index: 3, kind: input, shape index: {}]
  %s4 = inlined_call_operand.vmem [shape: f32[3,128], index: 4, kind: input, shape index: {}]
  %s5 = inlined_call_operand.hbm [shape: bf16[128,128], index: 5, kind: input, shape index: {}]
  %s6 = inlined_call_operand.vmem [shape: f32[1,128], index: 6, kind: input, shape index: {}]
  %s7 = inlined_call_operand.hbm [shape: f32[32,128], index: 7, kind: output, shape index: {}]
  %s8 = sld [smem:[#allocation0]]
  $region69: #{tpu_custom_call.1} parent=0
    _
  %s10 = ssub.s32 1, %s8
  %s11 = scalar_select 0, %s10, %s8
  $region1: #{tpu_custom_call.1} parent=0
    #allocation2 [shape = 'u8[32768]{0}', space=vmem, size = 0x8000, scoped, tag = 'input window, operand 3, single buffered']
    #allocation3 [shape = 's32[2]{0}', space=sflag, size = 0x8, scoped, tag = 'scoped memory for tpu_custom_call.1']
    #allocation4 [shape = 's32[2]{0}', space=sflag, size = 0x8, scoped, tag = 'scoped memory for tpu_custom_call.1']
    #allocation5 [shape = 'u8[32768]{0}', space=vmem, size = 0x8000, scoped, tag = 'input window, operand 5, single buffered']
    #allocation6 [shape = 's32[1]{0}', space=sflag, size = 0x4, scoped, tag = 'scoped memory for tpu_custom_call.1']
    #allocation7 [shape = 'u8[16384]{0}', space=vmem, size = 0x4000, scoped, tag = 'output window, operand 0']
    %12 = vsyncpa [#allocation3], 0
    %13 = vsyncpa [#allocation6], 0
    %14 = vsyncpa [#allocation4], 0
    %s15 = scalar_lea.sflag [#allocation4], 1
    %16 = vsyncpa %s15, 0
    loop: start=0, step=1, limit=4
    $region2: #{tpu_custom_call.1} parent=1 // loop_pre_header
      _
    $region3: #{tpu_custom_call.1} parent=1 // loop_header
      %s18 = sphi 0, %s22
      %p19 = scmp.ge.s32.totalorder %s18, 4
      %s28 = sphi 0, %s30
      %s31 = sphi 0, %s28
      %s32 = sphi 0, %s31
      %s48 = sphi 0, %s32
      %s52 = sphi 0, %s52
      %s54 = sphi 0, %s52
      %s55 = sphi 0, %s54
      %s69 = sphi 0, %s55
      %s73 = sphi 0, %s73
      %s75 = sphi 0, %s73
      %s76 = sphi 0, %s75
      %s90 = sphi 0, %s76
      %s94 = sphi 0, %s94
      %s96 = sphi 0, %s94
      %s97 = sphi 0, %s96
      %s111 = sphi 0, %s97
      %s115 = sphi 0, %s115
      %s117 = sphi 0, %s115
      %s118 = sphi 0, %s117
      %s132 = sphi 0, %s118
      %s136 = sphi 0, %s136
      %s138 = sphi 0, %s136
      %s139 = sphi 0, %s138
      %s153 = sphi 0, %s139
      %s157 = sphi 0, %s157
      %s159 = sphi 0, %s157
      %s160 = sphi 0, %s159
      %s174 = sphi 0, %s160
      %s180 = sphi 0, %s182
      %s183 = sphi 0, %s180
      %s184 = sphi 0, %s183
      %s200 = sphi 0, %s184
    $region4: #{tpu_custom_call.1} parent=1 // loop_header_branch
      %21 = sbr.rel (%p19) target = $region8
    $region5: #{tpu_custom_call.1} parent=1 // loop_body
      %s23 = ssub.s32 %s18, 1
      %s24 = ssub.s32 %s18, 2
      %s25 = sadd.s32 %s18, 1
      %s26 = ssub.s32 %s18, %s25
      %p27 = scmp.eq.s32.totalorder %s26, 0
      %s29 = sadd.s32 %s28, 1
      %s30 = scalar_select %p27, %s28, %s29
      %p33 = pneg %p27
      %p34 = scmp.eq.s32.totalorder %s18, 1
      %p35 = por %p33, %p34
      %p36 = scmp.ne.s32.totalorder %s28, %s31
      %p37 = scmp.eq.s32.totalorder %s18, 0
      %p38 = por %p36, %p37
      %p39 = scmp.ne.s32.totalorder %s28, %s31
      %p40 = scmp.eq.s32.totalorder %s23, 1
      %p41 = por %p39, %p40
      %p42 = scmp.ne.s32.totalorder %s31, %s32
      %p43 = scmp.eq.s32.totalorder %s23, 0
      %p44 = por %p42, %p43
      %p45 = scmp.ne.s32.totalorder %s31, %s32
      %p46 = scmp.eq.s32.totalorder %s24, 1
      %p47 = por %p45, %p46
      %p49 = scmp.ne.s32.totalorder %s32, %s48
      %p50 = scmp.eq.s32.totalorder %s24, 0
      %p51 = por %p49, %p50
      %s53 = sadd.s32 %s52, 1
      %p56 = scmp.eq.s32.totalorder %s18, 1
      %p57 = scmp.ne.s32.totalorder %s52, %s54
      %p58 = scmp.eq.s32.totalorder %s18, 0
      %p59 = por %p57, %p58
      %p60 = scmp.ne.s32.totalorder %s52, %s54
      %p61 = scmp.eq.s32.totalorder %s23, 1
      %p62 = por %p60, %p61
      %p63 = scmp.ne.s32.totalorder %s54, %s55
      %p64 = scmp.eq.s32.totalorder %s23, 0
      %p65 = por %p63, %p64
      %p66 = scmp.ne.s32.totalorder %s54, %s55
      %p67 = scmp.eq.s32.totalorder %s24, 1
      %p68 = por %p66, %p67
      %p70 = scmp.ne.s32.totalorder %s55, %s69
      %p71 = scmp.eq.s32.totalorder %s24, 0
      %p72 = por %p70, %p71
      %s74 = sadd.s32 %s73, 1
      %p77 = scmp.eq.s32.totalorder %s18, 1
      %p78 = scmp.ne.s32.totalorder %s73, %s75
      %p79 = scmp.eq.s32.totalorder %s18, 0
      %p80 = por %p78, %p79
      %p81 = scmp.ne.s32.totalorder %s73, %s75
      %p82 = scmp.eq.s32.totalorder %s23, 1
      %p83 = por %p81, %p82
      %p84 = scmp.ne.s32.totalorder %s75, %s76
      %p85 = scmp.eq.s32.totalorder %s23, 0
      %p86 = por %p84, %p85
      %p87 = scmp.ne.s32.totalorder %s75, %s76
      %p88 = scmp.eq.s32.totalorder %s24, 1
      %p89 = por %p87, %p88
      %p91 = scmp.ne.s32.totalorder %s76, %s90
      %p92 = scmp.eq.s32.totalorder %s24, 0
      %p93 = por %p91, %p92
      %s95 = sadd.s32 %s94, 1
      %p98 = scmp.eq.s32.totalorder %s18, 1
      %p99 = scmp.ne.s32.totalorder %s94, %s96
      %p100 = scmp.eq.s32.totalorder %s18, 0
      %p101 = por %p99, %p100
      %p102 = scmp.ne.s32.totalorder %s94, %s96
      %p103 = scmp.eq.s32.totalorder %s23, 1
      %p104 = por %p102, %p103
      %p105 = scmp.ne.s32.totalorder %s96, %s97
      %p106 = scmp.eq.s32.totalorder %s23, 0
      %p107 = por %p105, %p106
      %p108 = scmp.ne.s32.totalorder %s96, %s97
      %p109 = scmp.eq.s32.totalorder %s24, 1
      %p110 = por %p108, %p109
      %p112 = scmp.ne.s32.totalorder %s97, %s111
      %p113 = scmp.eq.s32.totalorder %s24, 0
      %p114 = por %p112, %p113
      %s116 = sadd.s32 %s115, 1
      %p119 = scmp.eq.s32.totalorder %s18, 1
      %p120 = scmp.ne.s32.totalorder %s115, %s117
      %p121 = scmp.eq.s32.totalorder %s18, 0
      %p122 = por %p120, %p121
      %p123 = scmp.ne.s32.totalorder %s115, %s117
      %p124 = scmp.eq.s32.totalorder %s23, 1
      %p125 = por %p123, %p124
      %p126 = scmp.ne.s32.totalorder %s117, %s118
      %p127 = scmp.eq.s32.totalorder %s23, 0
      %p128 = por %p126, %p127
      %p129 = scmp.ne.s32.totalorder %s117, %s118
      %p130 = scmp.eq.s32.totalorder %s24, 1
      %p131 = por %p129, %p130
      %p133 = scmp.ne.s32.totalorder %s118, %s132
      %p134 = scmp.eq.s32.totalorder %s24, 0
      %p135 = por %p133, %p134
      %s137 = sadd.s32 %s136, 1
      %p140 = scmp.eq.s32.totalorder %s18, 1
      %p141 = scmp.ne.s32.totalorder %s136, %s138
      %p142 = scmp.eq.s32.totalorder %s18, 0
      %p143 = por %p141, %p142
      %p144 = scmp.ne.s32.totalorder %s136, %s138
      %p145 = scmp.eq.s32.totalorder %s23, 1
      %p146 = por %p144, %p145
      %p147 = scmp.ne.s32.totalorder %s138, %s139
      %p148 = scmp.eq.s32.totalorder %s23, 0
      %p149 = por %p147, %p148
      %p150 = scmp.ne.s32.totalorder %s138, %s139
      %p151 = scmp.eq.s32.totalorder %s24, 1
      %p152 = por %p150, %p151
      %p154 = scmp.ne.s32.totalorder %s139, %s153
      %p155 = scmp.eq.s32.totalorder %s24, 0
      %p156 = por %p154, %p155
      %s158 = sadd.s32 %s157, 1
      %p161 = scmp.eq.s32.totalorder %s18, 1
      %p162 = scmp.ne.s32.totalorder %s157, %s159
      %p163 = scmp.eq.s32.totalorder %s18, 0
      %p164 = por %p162, %p163
      %p165 = scmp.ne.s32.totalorder %s157, %s159
      %p166 = scmp.eq.s32.totalorder %s23, 1
      %p167 = por %p165, %p166
      %p168 = scmp.ne.s32.totalorder %s159, %s160
      %p169 = scmp.eq.s32.totalorder %s23, 0
      %p170 = por %p168, %p169
      %p171 = scmp.ne.s32.totalorder %s159, %s160
      %p172 = scmp.eq.s32.totalorder %s24, 1
      %p173 = por %p171, %p172
      %p175 = scmp.ne.s32.totalorder %s160, %s174
      %p176 = scmp.eq.s32.totalorder %s24, 0
      %p177 = por %p175, %p176
      %s178 = ssub.s32 %s18, %s25
      %p179 = scmp.eq.s32.totalorder %s178, 0
      %s181 = sadd.s32 %s180, 1
      %s182 = scalar_select %p179, %s180, %s181
      %p185 = pneg %p179
      %p186 = scmp.eq.s32.totalorder %s18, 1
      %p187 = por %p185, %p186
      %p188 = scmp.ne.s32.totalorder %s180, %s183
      %p189 = scmp.eq.s32.totalorder %s18, 0
      %p190 = por %p188, %p189
      %p191 = scmp.ne.s32.totalorder %s180, %s183
      %p192 = scmp.eq.s32.totalorder %s23, 1
      %p193 = por %p191, %p192
      %p194 = scmp.ne.s32.totalorder %s183, %s184
      %p195 = scmp.eq.s32.totalorder %s23, 0
      %p196 = por %p194, %p195
      %p197 = scmp.ne.s32.totalorder %s183, %s184
      %p198 = scmp.eq.s32.totalorder %s24, 1
      %p199 = por %p197, %p198
      %p201 = scmp.ne.s32.totalorder %s184, %s200
      %p202 = scmp.eq.s32.totalorder %s24, 0
      %p203 = por %p201, %p202
      %p204 = scmp.le.s32.totalorder 1, %s18
      %p205 = scmp.lt.s32.totalorder %s18, 3
      %p206 = pnand %p204, %p205
      %p207 = pneg %p206
      // Predicated region
      $region9: #{tpu_custom_call.1} parent=5 // pred_check
        _
      $region10: #{tpu_custom_call.1} parent=5 // pred_check_branch
        %209 = sbr.rel (%p206) target = $region12
      $region11: #{tpu_custom_call.1} parent=5 // pred_region
        %s210 = ssub.s32 %s18, 1
        // Predicated region
        $region13: #{tpu_custom_call.1} parent=11 // pred_check
          %p211 = pneg %p65
        $region14: #{tpu_custom_call.1} parent=11 // pred_check_branch
          %213 = sbr.rel (%p211) target = $region16
        $region15: #{tpu_custom_call.1} parent=11 // pred_region
          _
        $region16: #{tpu_custom_call.1} parent=11 // pred_fallthru
          _
        // Predicated region
        $region17: #{tpu_custom_call.1} parent=11 // pred_check
          %p214 = pneg %p86
        $region18: #{tpu_custom_call.1} parent=11 // pred_check_branch
          %216 = sbr.rel (%p214) target = $region20
        $region19: #{tpu_custom_call.1} parent=11 // pred_region
          _
        $region20: #{tpu_custom_call.1} parent=11 // pred_fallthru
          _
        // Predicated region
        $region21: #{tpu_custom_call.1} parent=11 // pred_check
          %p217 = pneg %p107
        $region22: #{tpu_custom_call.1} parent=11 // pred_check_branch
          %219 = sbr.rel (%p217) target = $region24
        $region23: #{tpu_custom_call.1} parent=11 // pred_region
          %221 = vsyncadd [#allocation3], 0
          %s222 = sshll.u32 %s3, 4
          %s223 = int_to_ptr.hbm [resolvable:$true] %s222
          %s224 = sshll.u32 [#allocation2], 4
          %s225 = int_to_ptr.vmem [resolvable:$true] %s224
          %230 = dma.hbm_to_vmem [thread:$0]  %s223, 1024, %s225, [#allocation3], 64, 64, 4
        $region24: #{tpu_custom_call.1} parent=11 // pred_fallthru
          _
        // Predicated region
        $region25: #{tpu_custom_call.1} parent=11 // pred_check
          %p231 = pneg %p128
        $region26: #{tpu_custom_call.1} parent=11 // pred_check_branch
          %233 = sbr.rel (%p231) target = $region28
        $region27: #{tpu_custom_call.1} parent=11 // pred_region
          _
        $region28: #{tpu_custom_call.1} parent=11 // pred_fallthru
          _
        // Predicated region
        $region29: #{tpu_custom_call.1} parent=11 // pred_check
          %p234 = pneg %p149
        $region30: #{tpu_custom_call.1} parent=11 // pred_check_branch
          %236 = sbr.rel (%p234) target = $region32
        $region31: #{tpu_custom_call.1} parent=11 // pred_region
          %238 = vsyncadd [#allocation6], 0
          %s239 = sshll.u32 %s5, 4
          %s240 = int_to_ptr.hbm [resolvable:$true] %s239
          %s241 = sshll.u32 [#allocation5], 4
          %s242 = int_to_ptr.vmem [resolvable:$true] %s241
          %247 = dma.hbm_to_vmem [thread:$0]  %s240, 1024, %s242, [#allocation6], 64, 64, 4
        $region32: #{tpu_custom_call.1} parent=11 // pred_fallthru
          _
        // Predicated region
        $region33: #{tpu_custom_call.1} parent=11 // pred_check
          %p248 = pneg %p170
        $region34: #{tpu_custom_call.1} parent=11 // pred_check_branch
          %250 = sbr.rel (%p248) target = $region36
        $region35: #{tpu_custom_call.1} parent=11 // pred_region
          _
        $region36: #{tpu_custom_call.1} parent=11 // pred_fallthru
          _
      $region12: #{tpu_custom_call.1} parent=5 // pred_fallthru
        _
      %p251 = scmp.lt.s32.totalorder %s18, 2
      // Predicated region
      $region37: #{tpu_custom_call.1} parent=5 // pred_check
        %p252 = pneg %p251
      $region38: #{tpu_custom_call.1} parent=5 // pred_check_branch
        %254 = sbr.rel (%p252) target = $region40
      $region39: #{tpu_custom_call.1} parent=5 // pred_region
        // Predicated region
        $region41: #{tpu_custom_call.1} parent=39 // pred_check
          %p255 = pneg %p38
        $region42: #{tpu_custom_call.1} parent=39 // pred_check_branch
          %257 = sbr.rel (%p255) target = $region44
        $region43: #{tpu_custom_call.1} parent=39 // pred_region
          %s258 = smul.u32 2, %s18
          %p259 = scmp.lt.s32.totalorder %s258, 3
          %s260 = scalar_select %p259, %s258, 3
          %s261 = smul.addr %s260, 4
          %s262 = scalar_lea.vmem %s0, %s261
          %s263 = smul.u32 2, %s18
        $region44: #{tpu_custom_call.1} parent=39 // pred_fallthru
          _
      $region40: #{tpu_custom_call.1} parent=5 // pred_fallthru
        _
      %p264 = scmp.le.s32.totalorder 1, %s18
      %p265 = scmp.lt.s32.totalorder %s18, 3
      %p266 = pnand %p264, %p265
      %p267 = pneg %p266
      // Predicated region
      $region45: #{tpu_custom_call.1} parent=5 // pred_check
        _
      $region46: #{tpu_custom_call.1} parent=5 // pred_check_branch
        %269 = sbr.rel (%p266) target = $region48
      $region47: #{tpu_custom_call.1} parent=5 // pred_region
        %s270 = ssub.s32 %s18, 1
        // Predicated region
        $region49: #{tpu_custom_call.1} parent=47 // pred_check
          %p271 = pneg %p107
        $region50: #{tpu_custom_call.1} parent=47 // pred_check_branch
          %273 = sbr.rel (%p271) target = $region52
        $region51: #{tpu_custom_call.1} parent=47 // pred_region
          %275 = dma.done [#allocation3], 1024
        $region52: #{tpu_custom_call.1} parent=47 // pred_fallthru
          _
        // Predicated region
        $region53: #{tpu_custom_call.1} parent=47 // pred_check
          %p276 = pneg %p149
        $region54: #{tpu_custom_call.1} parent=47 // pred_check_branch
          %278 = sbr.rel (%p276) target = $region56
        $region55: #{tpu_custom_call.1} parent=47 // pred_region
          %280 = dma.done [#allocation6], 1024
        $region56: #{tpu_custom_call.1} parent=47 // pred_fallthru
          _
        %s281 = smul.u32 2, %s23
        %p282 = scmp.lt.s32.totalorder %s281, 3
        %s283 = scalar_select %p282, %s281, 3
        %s284 = smul.addr %s283, 4
        %s285 = scalar_lea.vmem %s0, %s284
        %p286 = pneg %p44
        %p287 = pneg %p41
        %p288 = pneg %p65
        %p289 = pneg %p62
        %p290 = pneg %p86
        %p291 = pneg %p83
        %p292 = pneg %p107
        %p293 = pneg %p104
        %p294 = pneg %p128
        %p295 = pneg %p125
        %p296 = pneg %p149
        %p297 = pneg %p146
        %p298 = pneg %p170
        %p299 = pneg %p167
        %p300 = pneg %p196
        %p301 = pneg %p193
        %s302 = sand.u32 %s183, 1
        %s303 = scalar_lea.sflag [#allocation4], %s302
        %s304 = sand.u32 %s183, 1
        %s305 = smul.addr %s304, 16
        %s306 = scalar_lea.vmem [#allocation7], %s305
        %s307 = smul.u32 2, %s23
        %p308 = scmp.lt.s32.totalorder %s307, 3
        %s309 = scalar_select %p308, %s307, 3
        %s310 = smul.addr %s309, 4
        %s311 = scalar_lea.vmem %s0, %s310
        %s312 = smul.u32 2, %s23
        %s313 = smul.u32 2, %s23
        %v315 = vld [vmem:[%s311] sm:$0xf]
        %v316 = vld [vmem:[%s311 + $0x4] sm:$0xf]
        %v317 = vld [vmem:[%s2] sm:$0x7]
        %v318 = vld [vmem:[%s4] sm:$0x7]
        %v319 = vld [vmem:[%s1] sm:$0xf]
        %v320 = vld [vmem:[%s1 + $0x4] sm:$0xf]
        %v321 = vperm.slane %v317, 0
        %v324 = vunpack.c.l.b16 %v315
        %v325 = vunpack.c.l.b16 %v316
        %v326 = vpack.c.b16 %v325, %v324
        %v329 = vunpack.c.l.b16 %v319
        %v330 = vunpack.c.l.b16 %v320
        %v331 = vpack.c.b16 %v330, %v329
        %vm333 = vcmask 130048
        %v335 = vsel %vm333, %v326, 0
        %337 = vmatpush.bf16.msra.mxu0 0
        %338 = vmatpush.bf16.msra.mxu0 0
        %339 = vmatpush.bf16.msra.mxu0 0
        %340 = vmatpush.bf16.msra.mxu0 0
        %341 = vmatpush.bf16.msra.mxu0 0
        %342 = vmatpush.bf16.msra.mxu0 0
        %343 = vmatpush.bf16.msra.mxu0 0
        %344 = vmatpush.bf16.msra.mxu0 %v331
        %345 = vmatmul.bf16.gmra.mxu0 %v335
        %v346 = vpop.f32.mrf.mxu0
        %v347 = vadd.f32 %v321, %v346
        %v348 = vpop.f32.mrf.mxu0
        %v349 = vadd.f32 %v321, %v348
        %350 = vdwg.mxu0
        %351 = vadd.xlane.f32.xlu0 %v347
        %v352 = vpop.xlane.xlu0 %351
        %353 = vadd.xlane.f32.xlu0 %v349
        %v354 = vpop.xlane.xlu0 %353
        %v355 = vmul.f32 %v352, 0.015625
        %v356 = vmul.f32 %v354, 0.015625
        %v357 = vmul.f32 %v347, %v347
        %v358 = vmul.f32 %v349, %v349
        %359 = vadd.xlane.f32.xlu0 %v357
        %v360 = vpop.xlane.xlu0 %359
        %361 = vadd.xlane.f32.xlu0 %v358
        %v362 = vpop.xlane.xlu0 %361
        %v363 = vmul.f32 %v360, 0.015625
        %v364 = vmul.f32 %v362, 0.015625
        %v365 = vmul.f32 %v355, %v355
        %v366 = vmul.f32 %v356, %v356
        %v367 = vsub.f32 %v363, %v365
        %v368 = vsub.f32 %v364, %v366
        %v369 = vmax.f32 %v367, 0.0
        %v370 = vmax.f32 %v368, 0.0
        %v371 = vsub.f32 %v347, %v355
        %v372 = vsub.f32 %v349, %v356
        %v373 = vadd.f32 %v369, 1e-05
        %v374 = vadd.f32 %v370, 1e-05
        %v375 = vrsqrt.pop %v373
        %v376 = vmul.f32 %v375, %v373
        %v377 = vmul.f32 %v376, %v375
        %v378 = vmul.f32 0.5, %v377
        %v379 = vsub.f32 1.5, %v378
        %v380 = vmul.f32 %v375, %v379
        %vm381 = vweird.f32 %v373
        %vm382 = vweird.f32 %v375
        %vm383 = vmor %vm381, %vm382
        %v384 = vsel %vm383, %v375, %v380
        %v385 = vrsqrt.pop %v374
        %v386 = vmul.f32 %v385, %v374
        %v387 = vmul.f32 %v386, %v385
        %v388 = vmul.f32 0.5, %v387
        %v389 = vsub.f32 1.5, %v388
        %v390 = vmul.f32 %v385, %v389
        %vm391 = vweird.f32 %v374
        %vm392 = vweird.f32 %v385
        %vm393 = vmor %vm391, %vm392
        %v394 = vsel %vm393, %v385, %v390
        %v395 = vmul.f32 %v371, %v384
        %v396 = vmul.f32 %v372, %v394
        %v397 = vperm.slane %v317, 1
        %v398 = vmul.f32 %v395, %v397
        %v399 = vmul.f32 %v396, %v397
        %v400 = vperm.slane %v317, 2
        %v401 = vadd.f32 %v398, %v400
        %v402 = vadd.f32 %v399, %v400
        %vm403 = vcmp.gt.f32.partialorder %v401, 0.0
        %vm404 = vcmp.gt.f32.partialorder %v402, 0.0
        %v405 = vmul.f32 %v401, 0.01
        %v406 = vmul.f32 %v402, 0.01
        %v407 = vsel %vm403, %v401, %v405
        %v408 = vsel %vm404, %v402, %v406
        %v409 = vpack.c.bf16 %v408, %v407
        %v410 = vld [vmem:[#allocation2] sm:$0xf]
        %v411 = vld [vmem:[#allocation2 + $0x4] sm:$0xf]
        %v412 = vld [vmem:[#allocation2 + $0x8] sm:$0xf]
        %v413 = vld [vmem:[#allocation2 + $0xc] sm:$0xf]
        %v414 = vld [vmem:[#allocation2 + $0x10] sm:$0xf]
        %v415 = vld [vmem:[#allocation2 + $0x14] sm:$0xf]
        %v416 = vld [vmem:[#allocation2 + $0x18] sm:$0xf]
        %v417 = vld [vmem:[#allocation2 + $0x1c] sm:$0xf]
        %v418 = vld [vmem:[#allocation2 + $0x20] sm:$0xf]
        %v419 = vld [vmem:[#allocation2 + $0x24] sm:$0xf]
        %v420 = vld [vmem:[#allocation2 + $0x28] sm:$0xf]
        %v421 = vld [vmem:[#allocation2 + $0x2c] sm:$0xf]
        %v422 = vld [vmem:[#allocation2 + $0x30] sm:$0xf]
        %v423 = vld [vmem:[#allocation2 + $0x34] sm:$0xf]
        %v424 = vld [vmem:[#allocation2 + $0x38] sm:$0xf]
        %v425 = vld [vmem:[#allocation2 + $0x3c] sm:$0xf]
        %v426 = vperm.slane %v318, 0
        %v443 = vunpack.c.l.b16 %v410
        %v444 = vunpack.c.l.b16 %v411
        %v445 = vunpack.c.l.b16 %v412
        %v446 = vunpack.c.l.b16 %v413
        %v447 = vunpack.c.l.b16 %v414
        %v448 = vunpack.c.l.b16 %v415
        %v449 = vunpack.c.l.b16 %v416
        %v450 = vunpack.c.l.b16 %v417
        %v451 = vunpack.c.l.b16 %v418
        %v452 = vunpack.c.l.b16 %v419
        %v453 = vunpack.c.l.b16 %v420
        %v454 = vunpack.c.l.b16 %v421
        %v455 = vunpack.c.l.b16 %v422
        %v456 = vunpack.c.l.b16 %v423
        %v457 = vunpack.c.l.b16 %v424
        %v458 = vunpack.c.l.b16 %v425
        %v459 = vpack.c.b16 %v444, %v443
        %v460 = vpack.c.b16 %v446, %v445
        %v461 = vpack.c.b16 %v448, %v447
        %v462 = vpack.c.b16 %v450, %v449
        %v463 = vpack.c.b16 %v452, %v451
        %v464 = vpack.c.b16 %v454, %v453
        %v465 = vpack.c.b16 %v456, %v455
        %v466 = vpack.c.b16 %v458, %v457
        %475 = vmatpush.bf16.msra.mxu0 %v466
        %476 = vmatpush.bf16.msra.mxu0 %v465
        %477 = vmatpush.bf16.msra.mxu0 %v464
        %478 = vmatpush.bf16.msra.mxu0 %v463
        %479 = vmatpush.bf16.msra.mxu0 %v462
        %480 = vmatpush.bf16.msra.mxu0 %v461
        %481 = vmatpush.bf16.msra.mxu0 %v460
        %482 = vmatpush.bf16.msra.mxu0 %v459
        %483 = vmatmul.bf16.gmra.mxu0 %v409
        %v484 = vpop.f32.mrf.mxu0
        %v485 = vadd.f32 %v426, %v484
        %v486 = vpop.f32.mrf.mxu0
        %v487 = vadd.f32 %v426, %v486
        %488 = vdwg.mxu0
        %489 = vadd.xlane.f32.xlu0 %v485
        %v490 = vpop.xlane.xlu0 %489
        %491 = vadd.xlane.f32.xlu0 %v487
        %v492 = vpop.xlane.xlu0 %491
        %v493 = vmul.f32 %v490, 0.015625
        %v494 = vmul.f32 %v492, 0.015625
        %v495 = vmul.f32 %v485, %v485
        %v496 = vmul.f32 %v487, %v487
        %497 = vadd.xlane.f32.xlu0 %v495
        %v498 = vpop.xlane.xlu0 %497
        %499 = vadd.xlane.f32.xlu0 %v496
        %v500 = vpop.xlane.xlu0 %499
        %v501 = vmul.f32 %v498, 0.015625
        %v502 = vmul.f32 %v500, 0.015625
        %v503 = vmul.f32 %v493, %v493
        %v504 = vmul.f32 %v494, %v494
        %v505 = vsub.f32 %v501, %v503
        %v506 = vsub.f32 %v502, %v504
        %v507 = vmax.f32 %v505, 0.0
        %v508 = vmax.f32 %v506, 0.0
        %v509 = vsub.f32 %v485, %v493
        %v510 = vsub.f32 %v487, %v494
        %v511 = vadd.f32 %v507, 1e-05
        %v512 = vadd.f32 %v508, 1e-05
        %v513 = vrsqrt.pop %v511
        %v514 = vmul.f32 %v513, %v511
        %v515 = vmul.f32 %v514, %v513
        %v516 = vmul.f32 0.5, %v515
        %v517 = vsub.f32 1.5, %v516
        %v518 = vmul.f32 %v513, %v517
        %vm519 = vweird.f32 %v511
        %vm520 = vweird.f32 %v513
        %vm521 = vmor %vm519, %vm520
        %v522 = vsel %vm521, %v513, %v518
        %v523 = vrsqrt.pop %v512
        %v524 = vmul.f32 %v523, %v512
        %v525 = vmul.f32 %v524, %v523
        %v526 = vmul.f32 0.5, %v525
        %v527 = vsub.f32 1.5, %v526
        %v528 = vmul.f32 %v523, %v527
        %vm529 = vweird.f32 %v512
        %vm530 = vweird.f32 %v523
        %vm531 = vmor %vm529, %vm530
        %v532 = vsel %vm531, %v523, %v528
        %v533 = vmul.f32 %v509, %v522
        %v534 = vmul.f32 %v510, %v532
        %v535 = vperm.slane %v318, 1
        %v536 = vmul.f32 %v533, %v535
        %v537 = vmul.f32 %v534, %v535
        %v538 = vperm.slane %v318, 2
        %v539 = vadd.f32 %v536, %v538
        %v540 = vadd.f32 %v537, %v538
        %vm541 = vcmp.gt.f32.partialorder %v539, 0.0
        %vm542 = vcmp.gt.f32.partialorder %v540, 0.0
        %v543 = vmul.f32 %v539, 0.01
        %v544 = vmul.f32 %v540, 0.01
        %v545 = vsel %vm541, %v539, %v543
        %v546 = vsel %vm542, %v540, %v544
        %v547 = vpack.c.bf16 %v546, %v545
        %v548 = vld [vmem:[#allocation5] sm:$0xf]
        %v549 = vld [vmem:[#allocation5 + $0x4] sm:$0xf]
        %v550 = vld [vmem:[#allocation5 + $0x8] sm:$0xf]
        %v551 = vld [vmem:[#allocation5 + $0xc] sm:$0xf]
        %v552 = vld [vmem:[#allocation5 + $0x10] sm:$0xf]
        %v553 = vld [vmem:[#allocation5 + $0x14] sm:$0xf]
        %v554 = vld [vmem:[#allocation5 + $0x18] sm:$0xf]
        %v555 = vld [vmem:[#allocation5 + $0x1c] sm:$0xf]
        %v556 = vld [vmem:[#allocation5 + $0x20] sm:$0xf]
        %v557 = vld [vmem:[#allocation5 + $0x24] sm:$0xf]
        %v558 = vld [vmem:[#allocation5 + $0x28] sm:$0xf]
        %v559 = vld [vmem:[#allocation5 + $0x2c] sm:$0xf]
        %v560 = vld [vmem:[#allocation5 + $0x30] sm:$0xf]
        %v561 = vld [vmem:[#allocation5 + $0x34] sm:$0xf]
        %v562 = vld [vmem:[#allocation5 + $0x38] sm:$0xf]
        %v563 = vld [vmem:[#allocation5 + $0x3c] sm:$0xf]
        %v564 = vld [vmem:[%s6] sm:$0x1]
        %v566 = vperm.slane %v564, 0
        %v584 = vunpack.c.l.b16 %v548
        %v585 = vunpack.c.l.b16 %v549
        %v586 = vunpack.c.l.b16 %v550
        %v587 = vunpack.c.l.b16 %v551
        %v588 = vunpack.c.l.b16 %v552
        %v589 = vunpack.c.l.b16 %v553
        %v590 = vunpack.c.l.b16 %v554
        %v591 = vunpack.c.l.b16 %v555
        %v592 = vunpack.c.l.b16 %v556
        %v593 = vunpack.c.l.b16 %v557
        %v594 = vunpack.c.l.b16 %v558
        %v595 = vunpack.c.l.b16 %v559
        %v596 = vunpack.c.l.b16 %v560
        %v597 = vunpack.c.l.b16 %v561
        %v598 = vunpack.c.l.b16 %v562
        %v599 = vunpack.c.l.b16 %v563
        %v600 = vpack.c.b16 %v585, %v584
        %v601 = vpack.c.b16 %v587, %v586
        %v602 = vpack.c.b16 %v589, %v588
        %v603 = vpack.c.b16 %v591, %v590
        %v604 = vpack.c.b16 %v593, %v592
        %v605 = vpack.c.b16 %v595, %v594
        %v606 = vpack.c.b16 %v597, %v596
        %v607 = vpack.c.b16 %v599, %v598
        %616 = vmatpush.bf16.msra.mxu0 %v607
        %617 = vmatpush.bf16.msra.mxu0 %v606
        %618 = vmatpush.bf16.msra.mxu0 %v605
        %619 = vmatpush.bf16.msra.mxu0 %v604
        %620 = vmatpush.bf16.msra.mxu0 %v603
        %621 = vmatpush.bf16.msra.mxu0 %v602
        %622 = vmatpush.bf16.msra.mxu0 %v601
        %623 = vmatpush.bf16.msra.mxu0 %v600
        %624 = vmatmul.bf16.gmra.mxu0 %v547
        %v625 = vpop.f32.mrf.mxu0
        %v626 = vadd.f32 %v566, %v625
        %v627 = vpop.f32.mrf.mxu0
        %v628 = vadd.f32 %v566, %v627
        %629 = vdwg.mxu0
        %630 = vst [vmem:[%s306] sm:$0xff] %v626
        %631 = vst [vmem:[%s306 + $0x8] sm:$0xff] %v628
        %s632 = sand.u32 %s183, 1
        %s633 = scalar_lea.sflag [#allocation4], %s632
        %s634 = sand.u32 %s183, 1
        %s635 = smul.addr %s634, 16
        %s636 = scalar_lea.vmem [#allocation7], %s635
        // Predicated region
        $region57: #{tpu_custom_call.1} parent=47 // pred_check
          %p637 = pneg %p193
        $region58: #{tpu_custom_call.1} parent=47 // pred_check_branch
          %639 = sbr.rel (%p637) target = $region60
        $region59: #{tpu_custom_call.1} parent=47 // pred_region
          %s640 = smul.u32 2, %s23
          %642 = vsyncadd %s633, 0
          %s643 = smul.addr %s640, 8
          %s644 = scalar_lea.hbm %s7, %s643
          %s645 = sshll.u32 %s636, 4
          %s646 = int_to_ptr.vmem [resolvable:$true] %s645
          %s647 = sshll.u32 %s644, 4
          %s648 = int_to_ptr.hbm [resolvable:$true] %s647
          %653 = dma.vmem_to_hbm [thread:$0]  %s646, 256, %s648, %s633, 128, 128, 8
        $region60: #{tpu_custom_call.1} parent=47 // pred_fallthru
          _
      $region48: #{tpu_custom_call.1} parent=5 // pred_fallthru
        _
      %p654 = scmp.le.s32.totalorder 2, %s18
      // Predicated region
      $region61: #{tpu_custom_call.1} parent=5 // pred_check
        %p655 = pneg %p654
      $region62: #{tpu_custom_call.1} parent=5 // pred_check_branch
        %657 = sbr.rel (%p655) target = $region64
      $region63: #{tpu_custom_call.1} parent=5 // pred_region
        %s658 = ssub.s32 %s18, 2
        // Predicated region
        $region65: #{tpu_custom_call.1} parent=63 // pred_check
          %p659 = pneg %p199
        $region66: #{tpu_custom_call.1} parent=63 // pred_check_branch
          %661 = sbr.rel (%p659) target = $region68
        $region67: #{tpu_custom_call.1} parent=63 // pred_region
          %s662 = sand.u32 %s184, 1
          %s663 = scalar_lea.sflag [#allocation4], %s662
          %s664 = sand.u32 %s184, 1
          %s665 = smul.addr %s664, 16
          %s666 = scalar_lea.vmem [#allocation7], %s665
          %668 = dma.done %s663, 256
        $region68: #{tpu_custom_call.1} parent=63 // pred_fallthru
          _
      $region64: #{tpu_custom_call.1} parent=5 // pred_fallthru
        _
    $region6: #{tpu_custom_call.1} parent=1 // loop_footer
      %s22 = sadd.s32 1, %s18
    $region7: #{tpu_custom_call.1} parent=1 // loop_footer_branch
      %17 = sbr.rel target = $region3
    $region8: #{tpu_custom_call.1} parent=1 // loop_exit
      _
    %669 = vsyncpa [#allocation3], 1
    %s670 = scalar_lea.sflag [#allocation3], 1
    %671 = vsyncpa %s670, 1
    %672 = vsyncpa [#allocation6], 1
    %673 = vsyncpa [#allocation4], 1
    %s674 = scalar_lea.sflag [#allocation4], 1
    %675 = vsyncpa %s674, 1

</llo_original>
